<compile_context>
chip_gen: v5e
topology: v5e:2x2
jax: 0.10.0
libtpu: 0.0.40
codegen_flags: <defaults>
</compile_context>

<pallas_src>
import jax
import jax.numpy as jnp
from jax.experimental import pallas as pl
from jax.experimental.pallas import tpu as pltpu


# ------------------------------ Pallas kernels -------------------------------

def _gemm_bias_relu_kernel(p_ref, w_ref, b_ref, o_ref):
    """o = relu(p @ w + b).  p:(tm,K)  w:(K,N)  b:(1,N)  -> o:(tm,N)."""
    acc = jnp.dot(p_ref[...], w_ref[...], preferred_element_type=jnp.float32)
    o_ref[...] = jnp.maximum(acc + b_ref[...], 0.0).astype(o_ref.dtype)


def _head_kernel(p_ref, w3_ref, b3_ref, wl_ref, bl_ref, o_ref):
    """Fused conv3-as-GEMM + ReLU + Flatten(1x1) + Linear + ReLU."""
    h = jnp.dot(p_ref[...], w3_ref[...], preferred_element_type=jnp.float32)
    h = jnp.maximum(h + b3_ref[...], 0.0)
    o = jnp.dot(h, wl_ref[...], preferred_element_type=jnp.float32)
    o_ref[...] = jnp.maximum(o + bl_ref[...], 0.0).astype(o_ref.dtype)


# -------------------------------- wrappers -----------------------------------

def _gemm_bias_relu(p, w, b):
    """relu(p @ w + b) via Pallas; splits M into 2 parallel blocks when clean."""
    M, K = p.shape
    N = w.shape[1]
    if M % 2 == 0 and (M // 2) % 8 == 0:
        tm, grid = M // 2, (2,)        # >= 2 parallel steps -> both TCs on v7x
    else:
        tm, grid = M, (1,)             # single fused step (tiny problem)
    return pl.pallas_call(
        _gemm_bias_relu_kernel,
        out_shape=jax.ShapeDtypeStruct((M, N), jnp.float32),
        grid=grid,
        in_specs=[
            pl.BlockSpec((tm, K), lambda i: (i, 0)),   # activations (blocked on M)
            pl.BlockSpec((K, N), lambda i: (0, 0)),    # weight (resident)
            pl.BlockSpec((1, N), lambda i: (0, 0)),    # bias   (resident)
        ],
        out_specs=pl.BlockSpec((tm, N), lambda i: (i, 0)),
        compiler_params=pltpu.CompilerParams(dimension_semantics=("parallel",)),
    )(p, w, b)


def _head(p, w3, b3, wl, bl):
    B = p.shape[0]
    F = wl.shape[1]
    return pl.pallas_call(
        _head_kernel,
        out_shape=jax.ShapeDtypeStruct((B, F), jnp.float32),
    )(p, w3, b3, wl, bl)


def _im2col(x_nhwc, k, s):
    """(B,H,W,C) -> (B,OH,OW,k*k*C) patches via static strided slices.

    Pure layout plumbing (no FLOPs).  Feature order is (dy, dx, c), matching
    the GEMM weight layout built by `_conv_weight_to_gemm`.
    """
    B, H, W, C = x_nhwc.shape
    OH = (H - k) // s + 1
    OW = (W - k) // s + 1
    cols = []
    for dy in range(k):
        for dx in range(k):
            cols.append(x_nhwc[:, dy:dy + s * OH:s, dx:dx + s * OW:s, :])
    patches = jnp.stack(cols, axis=3)               # (B, OH, OW, k*k, C)
    return patches.reshape(B, OH, OW, k * k * C), OH, OW


def _conv_weight_to_gemm(w):
    """torch Conv2d weight (Cout, Cin, kH, kW) -> GEMM weight (kH*kW*Cin, Cout)."""
    c_out = w.shape[0]
    return jnp.transpose(w, (2, 3, 1, 0)).reshape(-1, c_out)


@jax.jit
def nature_cnn_forward(x_nchw, w1, b1, w2, b2, w3, b3, wl, bl):
    """NatureCNN.forward: linear(relu(cnn(x)))."""
    B = x_nchw.shape[0]
    x = jnp.transpose(x_nchw, (0, 2, 3, 1))         # NHWC: channels on lanes

    # conv1 (k=8, s=4) + ReLU
    p1, oh1, ow1 = _im2col(x, 8, 4)
    h1 = _gemm_bias_relu(p1.reshape(B * oh1 * ow1, -1),
                         _conv_weight_to_gemm(w1), b1.reshape(1, -1))
    h1 = h1.reshape(B, oh1, ow1, w1.shape[0])

    # conv2 (k=4, s=2) + ReLU
    p2, oh2, ow2 = _im2col(h1, 4, 2)
    h2 = _gemm_bias_relu(p2.reshape(B * oh2 * ow2, -1),
                         _conv_weight_to_gemm(w2), b2.reshape(1, -1))
    h2 = h2.reshape(B, oh2, ow2, w2.shape[0])

    # conv3 (k=3, s=1) + ReLU + Flatten + Linear + ReLU, fused in one kernel.
    p3, oh3, ow3 = _im2col(h2, 3, 1)
    assert oh3 == 1 and ow3 == 1, (
        f"fused head assumes a 1x1 conv3 spatial map, got {oh3}x{ow3}")
    # TODO(synk): for inputs whose conv3 output is >1x1 (e.g. 84x84 Atari),
    # split the head into a conv3 GEMM kernel + a separate Linear kernel with
    # the torch (C,H,W) flatten permutation done in the wrapper.
    out = _head(p3.reshape(B, -1),
                _conv_weight_to_gemm(w3), b3.reshape(1, -1),
                wl.T, bl.reshape(1, -1))
    return out


# --------------------------- pure-JAX reference ------------------------------

def _reference(x_nchw, w1, b1, w2, b2, w3, b3, wl, bl):
    hp = jax.lax.Precision.HIGHEST

    def conv(x, w, b, s):
        y = jax.lax.conv_general_dilated(
            x, w, window_strides=(s, s), padding="VALID",
            dimension_numbers=("NCHW", "OIHW", "NCHW"), precision=hp)
        return jax.nn.relu(y + b[None, :, None, None])

    h = conv(x_nchw, w1, b1, 4)
    h = conv(h, w2, b2, 2)
    h = conv(h, w3, b3, 1)
    h = h.reshape(h.shape[0], -1)                   # torch Flatten over (C,H,W)
    return jax.nn.relu(jnp.dot(h, wl.T, precision=hp) + bl)


if __name__ == "__main__":
    # Small shapes consistent with the module: 36x36 -> 8x8 -> 3x3 -> 1x1.
    B, C_in, H, W = 2, 4, 36, 36
    features_dim = 128

    key = jax.random.PRNGKey(0)
    kx, k1, k2, k3, k4, k5, k6, k7, k8 = jax.random.split(key, 9)

    x = jax.random.uniform(kx, (B, C_in, H, W), jnp.float32, 0.0, 1.0)

    def uinit(k, shape, fan_in):
        bound = 1.0 / jnp.sqrt(jnp.float32(fan_in))
        return jax.random.uniform(k, shape, jnp.float32, -bound, bound)

    w1 = uinit(k1, (32, C_in, 8, 8), C_in * 8 * 8)
    b1 = uinit(k2, (32,), C_in * 8 * 8)
    w2 = uinit(k3, (64, 32, 4, 4), 32 * 4 * 4)
    b2 = uinit(k4, (64,), 32 * 4 * 4)
    w3 = uinit(k5, (64, 64, 3, 3), 64 * 3 * 3)
    b3 = uinit(k6, (64,), 64 * 3 * 3)
    n_flatten = 64 * 1 * 1
    wl = uinit(k7, (features_dim, n_flatten), n_flatten)
    bl = uinit(k8, (features_dim,), n_flatten)

    out = nature_cnn_forward(x, w1, b1, w2, b2, w3, b3, wl, bl)
    jax.block_until_ready(out)

    ref = _reference(x, w1, b1, w2, b2, w3, b3, wl, bl)
    assert out.shape == (B, features_dim)
    assert jnp.allclose(out, ref, atol=1e-3, rtol=1e-3), \
        f"max abs err {float(jnp.max(jnp.abs(out - ref)))}"

    print("KERNEL_OK")
</pallas_src>

<mosaic_0001>
module attributes {stable_mosaic.version = 11 : i64} {
  func.func @_gemm_bias_relu_kernel(%arg0: i32, %arg1: memref<64x256xf32, #tpu.memory_space<vmem>>, %arg2: memref<256x32xf32, #tpu.memory_space<vmem>>, %arg3: memref<1x32xf32, #tpu.memory_space<vmem>>, %arg4: memref<64x32xf32, #tpu.memory_space<vmem>>) attributes {dimension_semantics = [#tpu.dimension_semantics<parallel>], iteration_bounds = array<i64: 2>, scalar_prefetch = 0 : i64, scratch_operands = 0 : i64, tpu.core_type = #tpu.core_type<tc>, window_params = [{transform_indices = @transform_0, window_bounds = array<i64: 64, 256>}, {pipeline_mode = #tpu.pipeline_mode<synchronous>, transform_indices = @transform_1, window_bounds = array<i64: 256, 32>}, {pipeline_mode = #tpu.pipeline_mode<synchronous>, transform_indices = @transform_2, window_bounds = array<i64: 1, 32>}, {transform_indices = @transform_3, window_bounds = array<i64: 64, 32>}]} {
    %c0 = arith.constant 0 : index
    %c0_0 = arith.constant 0 : index
    %0 = vector.load %arg1[%c0, %c0_0] : memref<64x256xf32, #tpu.memory_space<vmem>>, vector<64x256xf32>
    %c0_1 = arith.constant 0 : index
    %c0_2 = arith.constant 0 : index
    %1 = vector.load %arg2[%c0_1, %c0_2] : memref<256x32xf32, #tpu.memory_space<vmem>>, vector<256x32xf32>
    %cst = arith.constant dense<0.000000e+00> : vector<64x32xf32>
    %2 = tpu.matmul %0, %1, %cst {dimension_numbers = #tpu.dot_dimension_numbers<[1], [0], [0], [1], [0, 0, 1, 1], [], []>} : vector<64x256xf32>, vector<256x32xf32>, vector<64x32xf32> -> vector<64x32xf32>
    %c0_3 = arith.constant 0 : index
    %c0_4 = arith.constant 0 : index
    %3 = vector.load %arg3[%c0_3, %c0_4] : memref<1x32xf32, #tpu.memory_space<vmem>>, vector<1x32xf32>
    %4 = vector.broadcast %3 : vector<1x32xf32> to vector<64x32xf32>
    %5 = arith.addf %2, %4 : vector<64x32xf32>
    %cst_5 = arith.constant 0.000000e+00 : f32
    %6 = vector.broadcast %cst_5 : f32 to vector<64x32xf32>
    %7 = arith.maximumf %5, %6 : vector<64x32xf32>
    %c0_6 = arith.constant 0 : index
    %c0_7 = arith.constant 0 : index
    %8 = vector.load %arg4[%c0_6, %c0_7] : memref<64x32xf32, #tpu.memory_space<vmem>>, vector<64x32xf32>
    tpu.vector_store %arg4[%c0_6, %c0_7], %7 {strides = array<i32>} : memref<64x32xf32, #tpu.memory_space<vmem>>, vector<64x32xf32>,
    return
  }
  func.func @transform_0(%arg0: i32) -> (i32, i32) {
    %c0_i32 = arith.constant 0 : i32
    %c0_i32_0 = arith.constant 0 : i32
    return %arg0, %c0_i32 : i32, i32
  }
  func.func @transform_1(%arg0: i32) -> (i32, i32) {
    %c0_i32 = arith.constant 0 : i32
    %c0_i32_0 = arith.constant 0 : i32
    %c0_i32_1 = arith.constant 0 : i32
    return %c0_i32, %c0_i32_0 : i32, i32
  }
  func.func @transform_2(%arg0: i32) -> (i32, i32) {
    %c0_i32 = arith.constant 0 : i32
    %c0_i32_0 = arith.constant 0 : i32
    %c0_i32_1 = arith.constant 0 : i32
    return %c0_i32, %c0_i32_0 : i32, i32
  }
  func.func @transform_3(%arg0: i32) -> (i32, i32) {
    %c0_i32 = arith.constant 0 : i32
    %c0_i32_0 = arith.constant 0 : i32
    return %arg0, %c0_i32 : i32, i32
  }
}

module attributes {stable_mosaic.version = 11 : i64} {
  func.func @_gemm_bias_relu_kernel(%arg0: i32, %arg1: memref<18x512xf32, #tpu.memory_space<vmem>>, %arg2: memref<512x64xf32, #tpu.memory_space<vmem>>, %arg3: memref<1x64xf32, #tpu.memory_space<vmem>>, %arg4: memref<18x64xf32, #tpu.memory_space<vmem>>) attributes {dimension_semantics = [#tpu.dimension_semantics<parallel>], iteration_bounds = array<i64: 1>, scalar_prefetch = 0 : i64, scratch_operands = 0 : i64, tpu.core_type = #tpu.core_type<tc>, window_params = [{transform_indices = @transform_0, window_bounds = array<i64: 18, 512>}, {pipeline_mode = #tpu.pipeline_mode<synchronous>, transform_indices = @transform_1, window_bounds = array<i64: 512, 64>}, {pipeline_mode = #tpu.pipeline_mode<synchronous>, transform_indices = @transform_2, window_bounds = array<i64: 1, 64>}, {transform_indices = @transform_3, window_bounds = array<i64: 18, 64>}]} {
    %c0 = arith.constant 0 : index
    %c0_0 = arith.constant 0 : index
    %0 = vector.load %arg1[%c0, %c0_0] : memref<18x512xf32, #tpu.memory_space<vmem>>, vector<18x512xf32>
    %c0_1 = arith.constant 0 : index
    %c0_2 = arith.constant 0 : index
    %1 = vector.load %arg2[%c0_1, %c0_2] : memref<512x64xf32, #tpu.memory_space<vmem>>, vector<512x64xf32>
    %cst = arith.constant dense<0.000000e+00> : vector<18x64xf32>
    %2 = tpu.matmul %0, %1, %cst {dimension_numbers = #tpu.dot_dimension_numbers<[1], [0], [0], [1], [0, 0, 1, 1], [], []>} : vector<18x512xf32>, vector<512x64xf32>, vector<18x64xf32> -> vector<18x64xf32>
    %c0_3 = arith.constant 0 : index
    %c0_4 = arith.constant 0 : index
    %3 = vector.load %arg3[%c0_3, %c0_4] : memref<1x64xf32, #tpu.memory_space<vmem>>, vector<1x64xf32>
    %4 = vector.broadcast %3 : vector<1x64xf32> to vector<18x64xf32>
    %5 = arith.addf %2, %4 : vector<18x64xf32>
    %cst_5 = arith.constant 0.000000e+00 : f32
    %6 = vector.broadcast %cst_5 : f32 to vector<18x64xf32>
    %7 = arith.maximumf %5, %6 : vector<18x64xf32>
    %c0_6 = arith.constant 0 : index
    %c0_7 = arith.constant 0 : index
    %8 = vector.load %arg4[%c0_6, %c0_7] : memref<18x64xf32, #tpu.memory_space<vmem>>, vector<18x64xf32>
    tpu.vector_store %arg4[%c0_6, %c0_7], %7 {strides = array<i32>} : memref<18x64xf32, #tpu.memory_space<vmem>>, vector<18x64xf32>,
    return
  }
  func.func @transform_0(%arg0: i32) -> (i32, i32) {
    %c0_i32 = arith.constant 0 : i32
    %c0_i32_0 = arith.constant 0 : i32
    return %arg0, %c0_i32 : i32, i32
  }
  func.func @transform_1(%arg0: i32) -> (i32, i32) {
    %c0_i32 = arith.constant 0 : i32
    %c0_i32_0 = arith.constant 0 : i32
    %c0_i32_1 = arith.constant 0 : i32
    return %c0_i32, %c0_i32_0 : i32, i32
  }
  func.func @transform_2(%arg0: i32) -> (i32, i32) {
    %c0_i32 = arith.constant 0 : i32
    %c0_i32_0 = arith.constant 0 : i32
    %c0_i32_1 = arith.constant 0 : i32
    return %c0_i32, %c0_i32_0 : i32, i32
  }
  func.func @transform_3(%arg0: i32) -> (i32, i32) {
    %c0_i32 = arith.constant 0 : i32
    %c0_i32_0 = arith.constant 0 : i32
    return %arg0, %c0_i32 : i32, i32
  }
}

module attributes {stable_mosaic.version = 11 : i64} {
  func.func @_head_kernel(%arg0: memref<2x576xf32, #tpu.memory_space<vmem>>, %arg1: memref<576x64xf32, #tpu.memory_space<vmem>>, %arg2: memref<1x64xf32, #tpu.memory_space<vmem>>, %arg3: memref<64x128xf32, #tpu.memory_space<vmem>>, %arg4: memref<1x128xf32, #tpu.memory_space<vmem>>, %arg5: memref<2x128xf32, #tpu.memory_space<vmem>>) attributes {dimension_semantics = [], scalar_prefetch = 0 : i64, scratch_operands = 0 : i64, tpu.core_type = #tpu.core_type<tc>} {
    %c0 = arith.constant 0 : index
    %c0_0 = arith.constant 0 : index
    %0 = vector.load %arg0[%c0, %c0_0] : memref<2x576xf32, #tpu.memory_space<vmem>>, vector<2x576xf32>
    %c0_1 = arith.constant 0 : index
    %c0_2 = arith.constant 0 : index
    %1 = vector.load %arg1[%c0_1, %c0_2] : memref<576x64xf32, #tpu.memory_space<vmem>>, vector<576x64xf32>
    %cst = arith.constant dense<0.000000e+00> : vector<2x64xf32>
    %2 = tpu.matmul %0, %1, %cst {dimension_numbers = #tpu.dot_dimension_numbers<[1], [0], [0], [1], [0, 0, 1, 1], [], []>} : vector<2x576xf32>, vector<576x64xf32>, vector<2x64xf32> -> vector<2x64xf32>
    %c0_3 = arith.constant 0 : index
    %c0_4 = arith.constant 0 : index
    %3 = vector.load %arg2[%c0_3, %c0_4] : memref<1x64xf32, #tpu.memory_space<vmem>>, vector<1x64xf32>
    %4 = vector.broadcast %3 : vector<1x64xf32> to vector<2x64xf32>
    %5 = arith.addf %2, %4 : vector<2x64xf32>
    %cst_5 = arith.constant 0.000000e+00 : f32
    %6 = vector.broadcast %cst_5 : f32 to vector<2x64xf32>
    %7 = arith.maximumf %5, %6 : vector<2x64xf32>
    %c0_6 = arith.constant 0 : index
    %c0_7 = arith.constant 0 : index
    %8 = vector.load %arg3[%c0_6, %c0_7] : memref<64x128xf32, #tpu.memory_space<vmem>>, vector<64x128xf32>
    %cst_8 = arith.constant dense<0.000000e+00> : vector<2x128xf32>
    %9 = tpu.matmul %7, %8, %cst_8 {dimension_numbers = #tpu.dot_dimension_numbers<[1], [0], [0], [1], [0, 0, 1, 1], [], []>} : vector<2x64xf32>, vector<64x128xf32>, vector<2x128xf32> -> vector<2x128xf32>
    %c0_9 = arith.constant 0 : index
    %c0_10 = arith.constant 0 : index
    %10 = vector.load %arg4[%c0_9, %c0_10] : memref<1x128xf32, #tpu.memory_space<vmem>>, vector<1x128xf32>
    %11 = vector.broadcast %10 : vector<1x128xf32> to vector<2x128xf32>
    %12 = arith.addf %9, %11 : vector<2x128xf32>
    %cst_11 = arith.constant 0.000000e+00 : f32
    %13 = vector.broadcast %cst_11 : f32 to vector<2x128xf32>
    %14 = arith.maximumf %12, %13 : vector<2x128xf32>
    %c0_12 = arith.constant 0 : index
    %c0_13 = arith.constant 0 : index
    %15 = vector.load %arg5[%c0_12, %c0_13] : memref<2x128xf32, #tpu.memory_space<vmem>>, vector<2x128xf32>
    tpu.vector_store %arg5[%c0_12, %c0_13], %14 {strides = array<i32>} : memref<2x128xf32, #tpu.memory_space<vmem>>, vector<2x128xf32>,
    return
  }
}

</mosaic_0001>

<llo_original>
// kernel: nature_cnn_forward.3
$region0: #{nature_cnn_forward.3}
  #allocation0 [shape = 'u32[]', space=smem, size = 0x4, offset = 0x4, fixed_abs, tag = 'smem constant byte address 0x4 - core index']
  #allocation1 [shape = 'u32[72,128]{1,0:T(1,128)}', space=vmem, size = 0x9000, scoped, tag = 'internal scratch']
  %s0 = inlined_call_operand.vmem [shape: f32[128,256], index: 0, kind: input, shape index: {}]
  %s1 = inlined_call_operand.vmem [shape: f32[256,32], index: 1, kind: input, shape index: {}]
  %s2 = inlined_call_operand.vmem [shape: f32[1,32], index: 2, kind: input, shape index: {}]
  %s3 = inlined_call_operand.vmem [shape: f32[128,32], index: 3, kind: output, shape index: {}]
  %s4 = sld [smem:[#allocation0]]
  $region45: #{nature_cnn_forward.3} parent=0
    _
  %s6 = ssub.s32 1, %s4
  %s7 = scalar_select 0, %s6, %s4
  loop: start=0, step=1, limit=4
  $region2: #{nature_cnn_forward.3} parent=0 // loop_pre_header
    _
  $region3: #{nature_cnn_forward.3} parent=0 // loop_header
    %s9 = sphi 0, %s13
    %p10 = scmp.ge.s32.totalorder %s9, 4
    %s19 = sphi 0, %s21
    %s22 = sphi 0, %s19
    %s23 = sphi 0, %s22
    %s39 = sphi 0, %s23
    %s43 = sphi 0, %s43
    %s45 = sphi 0, %s43
    %s46 = sphi 0, %s45
    %s60 = sphi 0, %s46
    %s64 = sphi 0, %s64
    %s66 = sphi 0, %s64
    %s67 = sphi 0, %s66
    %s81 = sphi 0, %s67
    %s87 = sphi 0, %s89
    %s90 = sphi 0, %s87
    %s91 = sphi 0, %s90
    %s107 = sphi 0, %s91
  $region4: #{nature_cnn_forward.3} parent=0 // loop_header_branch
    %12 = sbr.rel (%p10) target = $region8
  $region5: #{nature_cnn_forward.3} parent=0 // loop_body
    %s14 = ssub.s32 %s9, 1
    %s15 = ssub.s32 %s9, 2
    %s16 = sadd.s32 %s9, 1
    %s17 = ssub.s32 %s9, %s16
    %p18 = scmp.eq.s32.totalorder %s17, 0
    %s20 = sadd.s32 %s19, 1
    %s21 = scalar_select %p18, %s19, %s20
    %p24 = pneg %p18
    %p25 = scmp.eq.s32.totalorder %s9, 1
    %p26 = por %p24, %p25
    %p27 = scmp.ne.s32.totalorder %s19, %s22
    %p28 = scmp.eq.s32.totalorder %s9, 0
    %p29 = por %p27, %p28
    %p30 = scmp.ne.s32.totalorder %s19, %s22
    %p31 = scmp.eq.s32.totalorder %s14, 1
    %p32 = por %p30, %p31
    %p33 = scmp.ne.s32.totalorder %s22, %s23
    %p34 = scmp.eq.s32.totalorder %s14, 0
    %p35 = por %p33, %p34
    %p36 = scmp.ne.s32.totalorder %s22, %s23
    %p37 = scmp.eq.s32.totalorder %s15, 1
    %p38 = por %p36, %p37
    %p40 = scmp.ne.s32.totalorder %s23, %s39
    %p41 = scmp.eq.s32.totalorder %s15, 0
    %p42 = por %p40, %p41
    %s44 = sadd.s32 %s43, 1
    %p47 = scmp.eq.s32.totalorder %s9, 1
    %p48 = scmp.ne.s32.totalorder %s43, %s45
    %p49 = scmp.eq.s32.totalorder %s9, 0
    %p50 = por %p48, %p49
    %p51 = scmp.ne.s32.totalorder %s43, %s45
    %p52 = scmp.eq.s32.totalorder %s14, 1
    %p53 = por %p51, %p52
    %p54 = scmp.ne.s32.totalorder %s45, %s46
    %p55 = scmp.eq.s32.totalorder %s14, 0
    %p56 = por %p54, %p55
    %p57 = scmp.ne.s32.totalorder %s45, %s46
    %p58 = scmp.eq.s32.totalorder %s15, 1
    %p59 = por %p57, %p58
    %p61 = scmp.ne.s32.totalorder %s46, %s60
    %p62 = scmp.eq.s32.totalorder %s15, 0
    %p63 = por %p61, %p62
    %s65 = sadd.s32 %s64, 1
    %p68 = scmp.eq.s32.totalorder %s9, 1
    %p69 = scmp.ne.s32.totalorder %s64, %s66
    %p70 = scmp.eq.s32.totalorder %s9, 0
    %p71 = por %p69, %p70
    %p72 = scmp.ne.s32.totalorder %s64, %s66
    %p73 = scmp.eq.s32.totalorder %s14, 1
    %p74 = por %p72, %p73
    %p75 = scmp.ne.s32.totalorder %s66, %s67
    %p76 = scmp.eq.s32.totalorder %s14, 0
    %p77 = por %p75, %p76
    %p78 = scmp.ne.s32.totalorder %s66, %s67
    %p79 = scmp.eq.s32.totalorder %s15, 1
    %p80 = por %p78, %p79
    %p82 = scmp.ne.s32.totalorder %s67, %s81
    %p83 = scmp.eq.s32.totalorder %s15, 0
    %p84 = por %p82, %p83
    %s85 = ssub.s32 %s9, %s16
    %p86 = scmp.eq.s32.totalorder %s85, 0
    %s88 = sadd.s32 %s87, 1
    %s89 = scalar_select %p86, %s87, %s88
    %p92 = pneg %p86
    %p93 = scmp.eq.s32.totalorder %s9, 1
    %p94 = por %p92, %p93
    %p95 = scmp.ne.s32.totalorder %s87, %s90
    %p96 = scmp.eq.s32.totalorder %s9, 0
    %p97 = por %p95, %p96
    %p98 = scmp.ne.s32.totalorder %s87, %s90
    %p99 = scmp.eq.s32.totalorder %s14, 1
    %p100 = por %p98, %p99
    %p101 = scmp.ne.s32.totalorder %s90, %s91
    %p102 = scmp.eq.s32.totalorder %s14, 0
    %p103 = por %p101, %p102
    %p104 = scmp.ne.s32.totalorder %s90, %s91
    %p105 = scmp.eq.s32.totalorder %s15, 1
    %p106 = por %p104, %p105
    %p108 = scmp.ne.s32.totalorder %s91, %s107
    %p109 = scmp.eq.s32.totalorder %s15, 0
    %p110 = por %p108, %p109
    %p111 = scmp.le.s32.totalorder 1, %s9
    %p112 = scmp.lt.s32.totalorder %s9, 3
    %p113 = pnand %p111, %p112
    %p114 = pneg %p113
    // Predicated region
    $region9: #{nature_cnn_forward.3} parent=5 // pred_check
      _
    $region10: #{nature_cnn_forward.3} parent=5 // pred_check_branch
      %116 = sbr.rel (%p113) target = $region12
    $region11: #{nature_cnn_forward.3} parent=5 // pred_region
      %s117 = ssub.s32 %s9, 1
      // Predicated region
      $region13: #{nature_cnn_forward.3} parent=11 // pred_check
        %p118 = pneg %p56
      $region14: #{nature_cnn_forward.3} parent=11 // pred_check_branch
        %120 = sbr.rel (%p118) target = $region16
      $region15: #{nature_cnn_forward.3} parent=11 // pred_region
        _
      $region16: #{nature_cnn_forward.3} parent=11 // pred_fallthru
        _
      // Predicated region
      $region17: #{nature_cnn_forward.3} parent=11 // pred_check
        %p121 = pneg %p77
      $region18: #{nature_cnn_forward.3} parent=11 // pred_check_branch
        %123 = sbr.rel (%p121) target = $region20
      $region19: #{nature_cnn_forward.3} parent=11 // pred_region
        _
      $region20: #{nature_cnn_forward.3} parent=11 // pred_fallthru
        _
    $region12: #{nature_cnn_forward.3} parent=5 // pred_fallthru
      _
    %p124 = scmp.lt.s32.totalorder %s9, 2
    // Predicated region
    $region21: #{nature_cnn_forward.3} parent=5 // pred_check
      %p125 = pneg %p124
    $region22: #{nature_cnn_forward.3} parent=5 // pred_check_branch
      %127 = sbr.rel (%p125) target = $region24
    $region23: #{nature_cnn_forward.3} parent=5 // pred_region
      // Predicated region
      $region25: #{nature_cnn_forward.3} parent=23 // pred_check
        %p128 = pneg %p29
      $region26: #{nature_cnn_forward.3} parent=23 // pred_check_branch
        %130 = sbr.rel (%p128) target = $region28
      $region27: #{nature_cnn_forward.3} parent=23 // pred_region
        %s131 = smul.u32 8, %s9
        %p132 = scmp.lt.s32.totalorder %s131, 15
        %s133 = scalar_select %p132, %s131, 15
        %s134 = smul.addr %s133, 2
        %s135 = smul.addr %s134, 8
        %s136 = scalar_lea.vmem %s0, %s135
        %s137 = smul.u32 8, %s9
      $region28: #{nature_cnn_forward.3} parent=23 // pred_fallthru
        _
    $region24: #{nature_cnn_forward.3} parent=5 // pred_fallthru
      _
    %p138 = scmp.le.s32.totalorder 1, %s9
    %p139 = scmp.lt.s32.totalorder %s9, 3
    %p140 = pnand %p138, %p139
    %p141 = pneg %p140
    // Predicated region
    $region29: #{nature_cnn_forward.3} parent=5 // pred_check
      _
    $region30: #{nature_cnn_forward.3} parent=5 // pred_check_branch
      %143 = sbr.rel (%p140) target = $region32
    $region31: #{nature_cnn_forward.3} parent=5 // pred_region
      %s144 = ssub.s32 %s9, 1
      %s145 = smul.u32 8, %s14
      %p146 = scmp.lt.s32.totalorder %s145, 15
      %s147 = scalar_select %p146, %s145, 15
      %s148 = smul.addr %s147, 2
      %s149 = smul.addr %s148, 8
      %s150 = scalar_lea.vmem %s0, %s149
      %p151 = pneg %p35
      %p152 = pneg %p32
      %p153 = pneg %p56
      %p154 = pneg %p53
      %p155 = pneg %p77
      %p156 = pneg %p74
      %p157 = pneg %p103
      %p158 = pneg %p100
      %s159 = smul.u32 8, %s14
      %p160 = scmp.lt.s32.totalorder %s159, 15
      %s161 = scalar_select %p160, %s159, 15
      %s162 = smul.addr %s161, 8
      %s163 = scalar_lea.vmem %s3, %s162
      %s164 = smul.u32 8, %s14
      %p165 = scmp.lt.s32.totalorder %s164, 15
      %s166 = scalar_select %p165, %s164, 15
      %s167 = smul.addr %s166, 2
      %s168 = smul.addr %s167, 8
      %s169 = scalar_lea.vmem %s0, %s168
      %s170 = smul.u32 8, %s14
      %s171 = smul.u32 8, %s14
      %p172 = scmp.lt.s32.totalorder %s171, 15
      %s173 = scalar_select %p172, %s171, 15
      %s174 = smul.addr %s173, 8
      %s175 = scalar_lea.vmem %s3, %s174
      %s176 = smul.u32 8, %s14
      %v177 = vld [vmem:[%s169] sm:$0xff]
      %v178 = vld [vmem:[%s169 + $0x8] sm:$0xff]
      %v179 = vld [vmem:[%s169 + $0x10] sm:$0xff]
      %v180 = vld [vmem:[%s169 + $0x18] sm:$0xff]
      %v181 = vld [vmem:[%s169 + $0x20] sm:$0xff]
      %v182 = vld [vmem:[%s169 + $0x28] sm:$0xff]
      %v183 = vld [vmem:[%s169 + $0x30] sm:$0xff]
      %v184 = vld [vmem:[%s169 + $0x38] sm:$0xff]
      %v185 = vld [vmem:[%s169 + $0x40] sm:$0xff]
      %v186 = vld [vmem:[%s169 + $0x48] sm:$0xff]
      %v187 = vld [vmem:[%s169 + $0x50] sm:$0xff]
      %v188 = vld [vmem:[%s169 + $0x58] sm:$0xff]
      %v189 = vld [vmem:[%s169 + $0x60] sm:$0xff]
      %v190 = vld [vmem:[%s169 + $0x68] sm:$0xff]
      %v191 = vld [vmem:[%s169 + $0x70] sm:$0xff]
      %v192 = vld [vmem:[%s169 + $0x78] sm:$0xff]
      %v193 = vld [vmem:[%s1] sm:$0xff]
      %v194 = vld [vmem:[%s1 + $0x8] sm:$0xff]
      %v195 = vld [vmem:[%s1 + $0x10] sm:$0xff]
      %v196 = vld [vmem:[%s1 + $0x18] sm:$0xff]
      %v197 = vld [vmem:[%s1 + $0x20] sm:$0xff]
      %v198 = vld [vmem:[%s1 + $0x28] sm:$0xff]
      %v199 = vld [vmem:[%s1 + $0x30] sm:$0xff]
      %v200 = vld [vmem:[%s1 + $0x38] sm:$0xff]
      %v201 = vld [vmem:[%s1 + $0x40] sm:$0xff]
      %v202 = vld [vmem:[%s1 + $0x48] sm:$0xff]
      %v203 = vld [vmem:[%s1 + $0x50] sm:$0xff]
      %v204 = vld [vmem:[%s1 + $0x58] sm:$0xff]
      %v205 = vld [vmem:[%s1 + $0x60] sm:$0xff]
      %v206 = vld [vmem:[%s1 + $0x68] sm:$0xff]
      %v207 = vld [vmem:[%s1 + $0x70] sm:$0xff]
      %v208 = vld [vmem:[%s1 + $0x78] sm:$0xff]
      %v209 = vld [vmem:[%s1 + $0x80] sm:$0xff]
      %v210 = vld [vmem:[%s1 + $0x88] sm:$0xff]
      %v211 = vld [vmem:[%s1 + $0x90] sm:$0xff]
      %v212 = vld [vmem:[%s1 + $0x98] sm:$0xff]
      %v213 = vld [vmem:[%s1 + $0xa0] sm:$0xff]
      %v214 = vld [vmem:[%s1 + $0xa8] sm:$0xff]
      %v215 = vld [vmem:[%s1 + $0xb0] sm:$0xff]
      %v216 = vld [vmem:[%s1 + $0xb8] sm:$0xff]
      %v217 = vld [vmem:[%s1 + $0xc0] sm:$0xff]
      %v218 = vld [vmem:[%s1 + $0xc8] sm:$0xff]
      %v219 = vld [vmem:[%s1 + $0xd0] sm:$0xff]
      %v220 = vld [vmem:[%s1 + $0xd8] sm:$0xff]
      %v221 = vld [vmem:[%s1 + $0xe0] sm:$0xff]
      %v222 = vld [vmem:[%s1 + $0xe8] sm:$0xff]
      %v223 = vld [vmem:[%s1 + $0xf0] sm:$0xff]
      %v224 = vld [vmem:[%s1 + $0xf8] sm:$0xff]
      %v225 = vld [vmem:[%s2] sm:$0x1]
      %v227 = vperm.slane %v225, 0
      %229 = vmatpush.msra.mxu0 %v208
      %230 = vmatpush.msra.mxu0 %v207
      %231 = vmatpush.msra.mxu0 %v206
      %232 = vmatpush.msra.mxu0 %v205
      %233 = vmatpush.msra.mxu0 %v204
      %234 = vmatpush.msra.mxu0 %v203
      %235 = vmatpush.msra.mxu0 %v202
      %236 = vmatpush.msra.mxu0 %v201
      %237 = vmatpush.msra.mxu0 %v200
      %238 = vmatpush.msra.mxu0 %v199
      %239 = vmatpush.msra.mxu0 %v198
      %240 = vmatpush.msra.mxu0 %v197
      %241 = vmatpush.msra.mxu0 %v196
      %242 = vmatpush.msra.mxu0 %v195
      %243 = vmatpush.msra.mxu0 %v194
      %244 = vmatpush.msra.mxu0 %v193
      %245 = vmatmul.f32.gmra.mxu0 %v177
      %v246 = vpop.f32.mrf.mxu0
      %v247 = vadd.f32 %v227, %v246
      %248 = vmatmul.f32.gmra.mxu0 %v179
      %v249 = vpop.f32.mrf.mxu0
      %v250 = vadd.f32 %v227, %v249
      %251 = vmatmul.f32.gmra.mxu0 %v181
      %v252 = vpop.f32.mrf.mxu0
      %v253 = vadd.f32 %v227, %v252
      %254 = vmatmul.f32.gmra.mxu0 %v183
      %v255 = vpop.f32.mrf.mxu0
      %v256 = vadd.f32 %v227, %v255
      %257 = vmatmul.f32.gmra.mxu0 %v185
      %v258 = vpop.f32.mrf.mxu0
      %v259 = vadd.f32 %v227, %v258
      %260 = vmatmul.f32.gmra.mxu0 %v187
      %v261 = vpop.f32.mrf.mxu0
      %v262 = vadd.f32 %v227, %v261
      %263 = vmatmul.f32.gmra.mxu0 %v189
      %v264 = vpop.f32.mrf.mxu0
      %v265 = vadd.f32 %v227, %v264
      %266 = vmatmul.f32.gmra.mxu0 %v191
      %v267 = vpop.f32.mrf.mxu0
      %v268 = vadd.f32 %v227, %v267
      %269 = vdwg.mxu0
      %270 = vmatpush.msra.mxu0 %v224
      %271 = vmatpush.msra.mxu0 %v223
      %272 = vmatpush.msra.mxu0 %v222
      %273 = vmatpush.msra.mxu0 %v221
      %274 = vmatpush.msra.mxu0 %v220
      %275 = vmatpush.msra.mxu0 %v219
      %276 = vmatpush.msra.mxu0 %v218
      %277 = vmatpush.msra.mxu0 %v217
      %278 = vmatpush.msra.mxu0 %v216
      %279 = vmatpush.msra.mxu0 %v215
      %280 = vmatpush.msra.mxu0 %v214
      %281 = vmatpush.msra.mxu0 %v213
      %282 = vmatpush.msra.mxu0 %v212
      %283 = vmatpush.msra.mxu0 %v211
      %284 = vmatpush.msra.mxu0 %v210
      %285 = vmatpush.msra.mxu0 %v209
      %286 = vmatmul.f32.gmra.mxu0 %v178
      %v287 = vpop.f32.mrf.mxu0
      %v288 = vadd.f32 %v247, %v287
      %289 = vmatmul.f32.gmra.mxu0 %v180
      %v290 = vpop.f32.mrf.mxu0
      %v291 = vadd.f32 %v250, %v290
      %292 = vmatmul.f32.gmra.mxu0 %v182
      %v293 = vpop.f32.mrf.mxu0
      %v294 = vadd.f32 %v253, %v293
      %295 = vmatmul.f32.gmra.mxu0 %v184
      %v296 = vpop.f32.mrf.mxu0
      %v297 = vadd.f32 %v256, %v296
      %298 = vmatmul.f32.gmra.mxu0 %v186
      %v299 = vpop.f32.mrf.mxu0
      %v300 = vadd.f32 %v259, %v299
      %301 = vmatmul.f32.gmra.mxu0 %v188
      %v302 = vpop.f32.mrf.mxu0
      %v303 = vadd.f32 %v262, %v302
      %304 = vmatmul.f32.gmra.mxu0 %v190
      %v305 = vpop.f32.mrf.mxu0
      %v306 = vadd.f32 %v265, %v305
      %307 = vmatmul.f32.gmra.mxu0 %v192
      %v308 = vpop.f32.mrf.mxu0
      %v309 = vadd.f32 %v268, %v308
      %310 = vdwg.mxu0
      %v311 = vmax.f32 %v288, 0.0
      %v312 = vmax.f32 %v291, 0.0
      %v313 = vmax.f32 %v294, 0.0
      %v314 = vmax.f32 %v297, 0.0
      %v315 = vmax.f32 %v300, 0.0
      %v316 = vmax.f32 %v303, 0.0
      %v317 = vmax.f32 %v306, 0.0
      %v318 = vmax.f32 %v309, 0.0
      %vm319 = vcmask 261120
      %320 = vst.msk [vmem:[%s175] sm:$0xff] %vm319, %v311
      %321 = vst.msk [vmem:[%s175 + $0x8] sm:$0xff] %vm319, %v312
      %322 = vst.msk [vmem:[%s175 + $0x10] sm:$0xff] %vm319, %v313
      %323 = vst.msk [vmem:[%s175 + $0x18] sm:$0xff] %vm319, %v314
      %324 = vst.msk [vmem:[%s175 + $0x20] sm:$0xff] %vm319, %v315
      %325 = vst.msk [vmem:[%s175 + $0x28] sm:$0xff] %vm319, %v316
      %326 = vst.msk [vmem:[%s175 + $0x30] sm:$0xff] %vm319, %v317
      %327 = vst.msk [vmem:[%s175 + $0x38] sm:$0xff] %vm319, %v318
      %s328 = smul.u32 8, %s14
      %p329 = scmp.lt.s32.totalorder %s328, 15
      %s330 = scalar_select %p329, %s328, 15
      %s331 = smul.addr %s330, 8
      %s332 = scalar_lea.vmem %s3, %s331
      // Predicated region
      $region33: #{nature_cnn_forward.3} parent=31 // pred_check
        %p333 = pneg %p100
      $region34: #{nature_cnn_forward.3} parent=31 // pred_check_branch
        %335 = sbr.rel (%p333) target = $region36
      $region35: #{nature_cnn_forward.3} parent=31 // pred_region
        %s336 = smul.u32 8, %s14
      $region36: #{nature_cnn_forward.3} parent=31 // pred_fallthru
        _
    $region32: #{nature_cnn_forward.3} parent=5 // pred_fallthru
      _
    %p337 = scmp.le.s32.totalorder 2, %s9
    // Predicated region
    $region37: #{nature_cnn_forward.3} parent=5 // pred_check
      %p338 = pneg %p337
    $region38: #{nature_cnn_forward.3} parent=5 // pred_check_branch
      %340 = sbr.rel (%p338) target = $region40
    $region39: #{nature_cnn_forward.3} parent=5 // pred_region
      %s341 = ssub.s32 %s9, 2
      // Predicated region
      $region41: #{nature_cnn_forward.3} parent=39 // pred_check
        %p342 = pneg %p106
      $region42: #{nature_cnn_forward.3} parent=39 // pred_check_branch
        %344 = sbr.rel (%p342) target = $region44
      $region43: #{nature_cnn_forward.3} parent=39 // pred_region
        %s345 = smul.u32 8, %s15
        %p346 = scmp.lt.s32.totalorder %s345, 15
        %s347 = scalar_select %p346, %s345, 15
        %s348 = smul.addr %s347, 8
        %s349 = scalar_lea.vmem %s3, %s348
      $region44: #{nature_cnn_forward.3} parent=39 // pred_fallthru
        _
    $region40: #{nature_cnn_forward.3} parent=5 // pred_fallthru
      _
  $region6: #{nature_cnn_forward.3} parent=0 // loop_footer
    %s13 = sadd.s32 1, %s9
  $region7: #{nature_cnn_forward.3} parent=0 // loop_footer_branch
    %8 = sbr.rel target = $region3
  $region8: #{nature_cnn_forward.3} parent=0 // loop_exit
    _

// kernel: nature_cnn_forward.4
$region0: #{nature_cnn_forward.4}
  #allocation0 [shape = 'u32[]', space=smem, size = 0x4, offset = 0x4, fixed_abs, tag = 'smem constant byte address 0x4 - core index']
  #allocation1 [shape = 'u32[72,128]{1,0:T(1,128)}', space=vmem, size = 0x9000, scoped, tag = 'internal scratch']
  %s0 = inlined_call_operand.vmem [shape: f32[18,512], index: 0, kind: input, shape index: {}]
  %s1 = inlined_call_operand.vmem [shape: f32[512,64], index: 1, kind: input, shape index: {}]
  %s2 = inlined_call_operand.vmem [shape: f32[1,64], index: 2, kind: input, shape index: {}]
  %s3 = inlined_call_operand.vmem [shape: f32[18,64], index: 3, kind: output, shape index: {}]
  %s4 = sld [smem:[#allocation0]]
  $region22: #{nature_cnn_forward.4} parent=0
    _
  %s6 = ssub.s32 1, %s4
  %s7 = scalar_select 0, %s6, %s4
  // Predicated region
  $region2: #{nature_cnn_forward.4} parent=0 // pred_check
    _
  $region3: #{nature_cnn_forward.4} parent=0 // pred_check_branch
    %9 = sbr.rel (0) target = $region5
  $region4: #{nature_cnn_forward.4} parent=0 // pred_region
    _
  $region5: #{nature_cnn_forward.4} parent=0 // pred_fallthru
    _
  // Predicated region
  $region6: #{nature_cnn_forward.4} parent=0 // pred_check
    _
  $region7: #{nature_cnn_forward.4} parent=0 // pred_check_branch
    %11 = sbr.rel (0) target = $region9
  $region8: #{nature_cnn_forward.4} parent=0 // pred_region
    _
  $region9: #{nature_cnn_forward.4} parent=0 // pred_fallthru
    _
  // Predicated region
  $region10: #{nature_cnn_forward.4} parent=0 // pred_check
    _
  $region11: #{nature_cnn_forward.4} parent=0 // pred_check_branch
    %13 = sbr.rel (0) target = $region13
  $region12: #{nature_cnn_forward.4} parent=0 // pred_region
    _
  $region13: #{nature_cnn_forward.4} parent=0 // pred_fallthru
    _
  %v14 = vld [vmem:[%s0] sm:$0xff]
  %v15 = vld [vmem:[%s0 + $0x8] sm:$0xff]
  %v16 = vld [vmem:[%s0 + $0x10] sm:$0xff]
  %v17 = vld [vmem:[%s0 + $0x18] sm:$0xff]
  %v18 = vld [vmem:[%s0 + $0x20] sm:$0xff]
  %v19 = vld [vmem:[%s0 + $0x28] sm:$0xff]
  %v20 = vld [vmem:[%s0 + $0x30] sm:$0xff]
  %v21 = vld [vmem:[%s0 + $0x38] sm:$0xff]
  %v22 = vld [vmem:[%s0 + $0x40] sm:$0x3]
  %v23 = vld [vmem:[%s0 + $0x48] sm:$0x3]
  %v24 = vld [vmem:[%s0 + $0x50] sm:$0x3]
  %v25 = vld [vmem:[%s0 + $0x58] sm:$0x3]
  %v26 = vld [vmem:[%s1] sm:$0xff]
  %v27 = vld [vmem:[%s1 + $0x8] sm:$0xff]
  %v28 = vld [vmem:[%s1 + $0x10] sm:$0xff]
  %v29 = vld [vmem:[%s1 + $0x18] sm:$0xff]
  %v30 = vld [vmem:[%s1 + $0x20] sm:$0xff]
  %v31 = vld [vmem:[%s1 + $0x28] sm:$0xff]
  %v32 = vld [vmem:[%s1 + $0x30] sm:$0xff]
  %v33 = vld [vmem:[%s1 + $0x38] sm:$0xff]
  %v34 = vld [vmem:[%s1 + $0x40] sm:$0xff]
  %v35 = vld [vmem:[%s1 + $0x48] sm:$0xff]
  %v36 = vld [vmem:[%s1 + $0x50] sm:$0xff]
  %v37 = vld [vmem:[%s1 + $0x58] sm:$0xff]
  %v38 = vld [vmem:[%s1 + $0x60] sm:$0xff]
  %v39 = vld [vmem:[%s1 + $0x68] sm:$0xff]
  %v40 = vld [vmem:[%s1 + $0x70] sm:$0xff]
  %v41 = vld [vmem:[%s1 + $0x78] sm:$0xff]
  %v42 = vld [vmem:[%s1 + $0x80] sm:$0xff]
  %v43 = vld [vmem:[%s1 + $0x88] sm:$0xff]
  %v44 = vld [vmem:[%s1 + $0x90] sm:$0xff]
  %v45 = vld [vmem:[%s1 + $0x98] sm:$0xff]
  %v46 = vld [vmem:[%s1 + $0xa0] sm:$0xff]
  %v47 = vld [vmem:[%s1 + $0xa8] sm:$0xff]
  %v48 = vld [vmem:[%s1 + $0xb0] sm:$0xff]
  %v49 = vld [vmem:[%s1 + $0xb8] sm:$0xff]
  %v50 = vld [vmem:[%s1 + $0xc0] sm:$0xff]
  %v51 = vld [vmem:[%s1 + $0xc8] sm:$0xff]
  %v52 = vld [vmem:[%s1 + $0xd0] sm:$0xff]
  %v53 = vld [vmem:[%s1 + $0xd8] sm:$0xff]
  %v54 = vld [vmem:[%s1 + $0xe0] sm:$0xff]
  %v55 = vld [vmem:[%s1 + $0xe8] sm:$0xff]
  %v56 = vld [vmem:[%s1 + $0xf0] sm:$0xff]
  %v57 = vld [vmem:[%s1 + $0xf8] sm:$0xff]
  %v58 = vld [vmem:[%s1 + $0x100] sm:$0xff]
  %v59 = vld [vmem:[%s1 + $0x108] sm:$0xff]
  %v60 = vld [vmem:[%s1 + $0x110] sm:$0xff]
  %v61 = vld [vmem:[%s1 + $0x118] sm:$0xff]
  %v62 = vld [vmem:[%s1 + $0x120] sm:$0xff]
  %v63 = vld [vmem:[%s1 + $0x128] sm:$0xff]
  %v64 = vld [vmem:[%s1 + $0x130] sm:$0xff]
  %v65 = vld [vmem:[%s1 + $0x138] sm:$0xff]
  %v66 = vld [vmem:[%s1 + $0x140] sm:$0xff]
  %v67 = vld [vmem:[%s1 + $0x148] sm:$0xff]
  %v68 = vld [vmem:[%s1 + $0x150] sm:$0xff]
  %v69 = vld [vmem:[%s1 + $0x158] sm:$0xff]
  %v70 = vld [vmem:[%s1 + $0x160] sm:$0xff]
  %v71 = vld [vmem:[%s1 + $0x168] sm:$0xff]
  %v72 = vld [vmem:[%s1 + $0x170] sm:$0xff]
  %v73 = vld [vmem:[%s1 + $0x178] sm:$0xff]
  %v74 = vld [vmem:[%s1 + $0x180] sm:$0xff]
  %v75 = vld [vmem:[%s1 + $0x188] sm:$0xff]
  %v76 = vld [vmem:[%s1 + $0x190] sm:$0xff]
  %v77 = vld [vmem:[%s1 + $0x198] sm:$0xff]
  %v78 = vld [vmem:[%s1 + $0x1a0] sm:$0xff]
  %v79 = vld [vmem:[%s1 + $0x1a8] sm:$0xff]
  %v80 = vld [vmem:[%s1 + $0x1b0] sm:$0xff]
  %v81 = vld [vmem:[%s1 + $0x1b8] sm:$0xff]
  %v82 = vld [vmem:[%s1 + $0x1c0] sm:$0xff]
  %v83 = vld [vmem:[%s1 + $0x1c8] sm:$0xff]
  %v84 = vld [vmem:[%s1 + $0x1d0] sm:$0xff]
  %v85 = vld [vmem:[%s1 + $0x1d8] sm:$0xff]
  %v86 = vld [vmem:[%s1 + $0x1e0] sm:$0xff]
  %v87 = vld [vmem:[%s1 + $0x1e8] sm:$0xff]
  %v88 = vld [vmem:[%s1 + $0x1f0] sm:$0xff]
  %v89 = vld [vmem:[%s1 + $0x1f8] sm:$0xff]
  %v90 = vld [vmem:[%s2] sm:$0x1]
  %v92 = vperm.slane %v90, 0
  %94 = vmatpush.msra.mxu0 %v41
  %95 = vmatpush.msra.mxu0 %v40
  %96 = vmatpush.msra.mxu0 %v39
  %97 = vmatpush.msra.mxu0 %v38
  %98 = vmatpush.msra.mxu0 %v37
  %99 = vmatpush.msra.mxu0 %v36
  %100 = vmatpush.msra.mxu0 %v35
  %101 = vmatpush.msra.mxu0 %v34
  %102 = vmatpush.msra.mxu0 %v33
  %103 = vmatpush.msra.mxu0 %v32
  %104 = vmatpush.msra.mxu0 %v31
  %105 = vmatpush.msra.mxu0 %v30
  %106 = vmatpush.msra.mxu0 %v29
  %107 = vmatpush.msra.mxu0 %v28
  %108 = vmatpush.msra.mxu0 %v27
  %109 = vmatpush.msra.mxu0 %v26
  %110 = vmatmul.f32.gmra.mxu0 %v14
  %v111 = vpop.f32.mrf.mxu0
  %v112 = vadd.f32 %v92, %v111
  %113 = vmatmul.f32.gmra.mxu0 %v18
  %v114 = vpop.f32.mrf.mxu0
  %v115 = vadd.f32 %v92, %v114
  %116 = vmatmul.f32.gmra.mxu0 %v22
  %v117 = vpop.f32.mrf.mxu0
  %v118 = vadd.f32 %v92, %v117
  %119 = vdwg.mxu0
  %120 = vmatpush.msra.mxu0 %v57
  %121 = vmatpush.msra.mxu0 %v56
  %122 = vmatpush.msra.mxu0 %v55
  %123 = vmatpush.msra.mxu0 %v54
  %124 = vmatpush.msra.mxu0 %v53
  %125 = vmatpush.msra.mxu0 %v52
  %126 = vmatpush.msra.mxu0 %v51
  %127 = vmatpush.msra.mxu0 %v50
  %128 = vmatpush.msra.mxu0 %v49
  %129 = vmatpush.msra.mxu0 %v48
  %130 = vmatpush.msra.mxu0 %v47
  %131 = vmatpush.msra.mxu0 %v46
  %132 = vmatpush.msra.mxu0 %v45
  %133 = vmatpush.msra.mxu0 %v44
  %134 = vmatpush.msra.mxu0 %v43
  %135 = vmatpush.msra.mxu0 %v42
  %136 = vmatmul.f32.gmra.mxu0 %v15
  %v137 = vpop.f32.mrf.mxu0
  %v138 = vadd.f32 %v112, %v137
  %139 = vmatmul.f32.gmra.mxu0 %v19
  %v140 = vpop.f32.mrf.mxu0
  %v141 = vadd.f32 %v115, %v140
  %142 = vmatmul.f32.gmra.mxu0 %v23
  %v143 = vpop.f32.mrf.mxu0
  %v144 = vadd.f32 %v118, %v143
  %145 = vdwg.mxu0
  %146 = vmatpush.msra.mxu0 %v73
  %147 = vmatpush.msra.mxu0 %v72
  %148 = vmatpush.msra.mxu0 %v71
  %149 = vmatpush.msra.mxu0 %v70
  %150 = vmatpush.msra.mxu0 %v69
  %151 = vmatpush.msra.mxu0 %v68
  %152 = vmatpush.msra.mxu0 %v67
  %153 = vmatpush.msra.mxu0 %v66
  %154 = vmatpush.msra.mxu0 %v65
  %155 = vmatpush.msra.mxu0 %v64
  %156 = vmatpush.msra.mxu0 %v63
  %157 = vmatpush.msra.mxu0 %v62
  %158 = vmatpush.msra.mxu0 %v61
  %159 = vmatpush.msra.mxu0 %v60
  %160 = vmatpush.msra.mxu0 %v59
  %161 = vmatpush.msra.mxu0 %v58
  %162 = vmatmul.f32.gmra.mxu0 %v16
  %v163 = vpop.f32.mrf.mxu0
  %v164 = vadd.f32 %v138, %v163
  %165 = vmatmul.f32.gmra.mxu0 %v20
  %v166 = vpop.f32.mrf.mxu0
  %v167 = vadd.f32 %v141, %v166
  %168 = vmatmul.f32.gmra.mxu0 %v24
  %v169 = vpop.f32.mrf.mxu0
  %v170 = vadd.f32 %v144, %v169
  %171 = vdwg.mxu0
  %172 = vmatpush.msra.mxu0 %v89
  %173 = vmatpush.msra.mxu0 %v88
  %174 = vmatpush.msra.mxu0 %v87
  %175 = vmatpush.msra.mxu0 %v86
  %176 = vmatpush.msra.mxu0 %v85
  %177 = vmatpush.msra.mxu0 %v84
  %178 = vmatpush.msra.mxu0 %v83
  %179 = vmatpush.msra.mxu0 %v82
  %180 = vmatpush.msra.mxu0 %v81
  %181 = vmatpush.msra.mxu0 %v80
  %182 = vmatpush.msra.mxu0 %v79
  %183 = vmatpush.msra.mxu0 %v78
  %184 = vmatpush.msra.mxu0 %v77
  %185 = vmatpush.msra.mxu0 %v76
  %186 = vmatpush.msra.mxu0 %v75
  %187 = vmatpush.msra.mxu0 %v74
  %188 = vmatmul.f32.gmra.mxu0 %v17
  %v189 = vpop.f32.mrf.mxu0
  %v190 = vadd.f32 %v164, %v189
  %191 = vmatmul.f32.gmra.mxu0 %v21
  %v192 = vpop.f32.mrf.mxu0
  %v193 = vadd.f32 %v167, %v192
  %194 = vmatmul.f32.gmra.mxu0 %v25
  %v195 = vpop.f32.mrf.mxu0
  %v196 = vadd.f32 %v170, %v195
  %197 = vdwg.mxu0
  %v198 = vmax.f32 %v190, 0.0
  %v199 = vmax.f32 %v193, 0.0
  %v200 = vmax.f32 %v196, 0.0
  %vm201 = vcmask 523264
  %202 = vst.msk [vmem:[%s3] sm:$0xff] %vm201, %v198
  %203 = vst.msk [vmem:[%s3 + $0x8] sm:$0xff] %vm201, %v199
  %vm204 = vcmask 517120
  %205 = vst.msk [vmem:[%s3 + $0x10] sm:$0x3] %vm204, %v200
  // Predicated region
  $region14: #{nature_cnn_forward.4} parent=0 // pred_check
    _
  $region15: #{nature_cnn_forward.4} parent=0 // pred_check_branch
    %207 = sbr.rel (0) target = $region17
  $region16: #{nature_cnn_forward.4} parent=0 // pred_region
    _
  $region17: #{nature_cnn_forward.4} parent=0 // pred_fallthru
    _
  // Predicated region
  $region18: #{nature_cnn_forward.4} parent=0 // pred_check
    _
  $region19: #{nature_cnn_forward.4} parent=0 // pred_check_branch
    %209 = sbr.rel (0) target = $region21
  $region20: #{nature_cnn_forward.4} parent=0 // pred_region
    _
  $region21: #{nature_cnn_forward.4} parent=0 // pred_fallthru
    _

// kernel: nature_cnn_forward.5
$region0: #{nature_cnn_forward.5}
  #allocation0 [shape = 'u32[]', space=smem, size = 0x4, offset = 0x4, fixed_abs, tag = 'smem constant byte address 0x4 - core index']
  #allocation1 [shape = 'u32[72,128]{1,0:T(1,128)}', space=vmem, size = 0x9000, scoped, tag = 'internal scratch']
  %s0 = inlined_call_operand.vmem [shape: f32[2,576], index: 0, kind: input, shape index: {}]
  %s1 = inlined_call_operand.vmem [shape: f32[576,64], index: 1, kind: input, shape index: {}]
  %s2 = inlined_call_operand.vmem [shape: f32[1,64], index: 2, kind: input, shape index: {}]
  %s3 = inlined_call_operand.vmem [shape: f32[64,128], index: 3, kind: input, shape index: {}]
  %s4 = inlined_call_operand.vmem [shape: f32[1,128], index: 4, kind: input, shape index: {}]
  %s5 = inlined_call_operand.hbm [shape: f32[2,128], index: 5, kind: output, shape index: {}]
  %s6 = sld [smem:[#allocation0]]
  $region30: #{nature_cnn_forward.5} parent=0
    _
  %s8 = ssub.s32 1, %s6
  %s9 = scalar_select 0, %s8, %s6
  $region1: #{nature_cnn_forward.5} parent=0
    #allocation2 [shape = 'u8[1024]{0}', space=vmem, size = 0x400, scoped, tag = 'output window, operand 0, single buffered']
    #allocation3 [shape = 's32[1]{0}', space=sflag, size = 0x4, scoped, tag = 'scoped memory for nature_cnn_forward.5']
    %10 = vsyncpa [#allocation3], 0
    // Predicated region
    $region2: #{nature_cnn_forward.5} parent=1 // pred_check
      _
    $region3: #{nature_cnn_forward.5} parent=1 // pred_check_branch
      %12 = sbr.rel (0) target = $region5
    $region4: #{nature_cnn_forward.5} parent=1 // pred_region
      _
    $region5: #{nature_cnn_forward.5} parent=1 // pred_fallthru
      _
    // Predicated region
    $region6: #{nature_cnn_forward.5} parent=1 // pred_check
      _
    $region7: #{nature_cnn_forward.5} parent=1 // pred_check_branch
      %14 = sbr.rel (0) target = $region9
    $region8: #{nature_cnn_forward.5} parent=1 // pred_region
      _
    $region9: #{nature_cnn_forward.5} parent=1 // pred_fallthru
      _
    // Predicated region
    $region10: #{nature_cnn_forward.5} parent=1 // pred_check
      _
    $region11: #{nature_cnn_forward.5} parent=1 // pred_check_branch
      %16 = sbr.rel (0) target = $region13
    $region12: #{nature_cnn_forward.5} parent=1 // pred_region
      _
    $region13: #{nature_cnn_forward.5} parent=1 // pred_fallthru
      _
    // Predicated region
    $region14: #{nature_cnn_forward.5} parent=1 // pred_check
      _
    $region15: #{nature_cnn_forward.5} parent=1 // pred_check_branch
      %18 = sbr.rel (0) target = $region17
    $region16: #{nature_cnn_forward.5} parent=1 // pred_region
      _
    $region17: #{nature_cnn_forward.5} parent=1 // pred_fallthru
      _
    // Predicated region
    $region18: #{nature_cnn_forward.5} parent=1 // pred_check
      _
    $region19: #{nature_cnn_forward.5} parent=1 // pred_check_branch
      %20 = sbr.rel (0) target = $region21
    $region20: #{nature_cnn_forward.5} parent=1 // pred_region
      _
    $region21: #{nature_cnn_forward.5} parent=1 // pred_fallthru
      _
    %v21 = vld [vmem:[%s0] sm:$0xff]
    %v22 = vld [vmem:[%s0 + $0x8] sm:$0x3]
    %v23 = vld [vmem:[%s1] sm:$0xff]
    %v24 = vld [vmem:[%s1 + $0x8] sm:$0xff]
    %v25 = vld [vmem:[%s1 + $0x10] sm:$0xff]
    %v26 = vld [vmem:[%s1 + $0x18] sm:$0xff]
    %v27 = vld [vmem:[%s1 + $0x20] sm:$0xff]
    %v28 = vld [vmem:[%s1 + $0x28] sm:$0xff]
    %v29 = vld [vmem:[%s1 + $0x30] sm:$0xff]
    %v30 = vld [vmem:[%s1 + $0x38] sm:$0xff]
    %v31 = vld [vmem:[%s1 + $0x40] sm:$0xff]
    %v32 = vld [vmem:[%s1 + $0x48] sm:$0xff]
    %v33 = vld [vmem:[%s1 + $0x50] sm:$0xff]
    %v34 = vld [vmem:[%s1 + $0x58] sm:$0xff]
    %v35 = vld [vmem:[%s1 + $0x60] sm:$0xff]
    %v36 = vld [vmem:[%s1 + $0x68] sm:$0xff]
    %v37 = vld [vmem:[%s1 + $0x70] sm:$0xff]
    %v38 = vld [vmem:[%s1 + $0x78] sm:$0xff]
    %v39 = vld [vmem:[%s1 + $0x80] sm:$0xff]
    %v40 = vld [vmem:[%s1 + $0x88] sm:$0xff]
    %v41 = vld [vmem:[%s1 + $0x90] sm:$0xff]
    %v42 = vld [vmem:[%s1 + $0x98] sm:$0xff]
    %v43 = vld [vmem:[%s1 + $0xa0] sm:$0xff]
    %v44 = vld [vmem:[%s1 + $0xa8] sm:$0xff]
    %v45 = vld [vmem:[%s1 + $0xb0] sm:$0xff]
    %v46 = vld [vmem:[%s1 + $0xb8] sm:$0xff]
    %v47 = vld [vmem:[%s1 + $0xc0] sm:$0xff]
    %v48 = vld [vmem:[%s1 + $0xc8] sm:$0xff]
    %v49 = vld [vmem:[%s1 + $0xd0] sm:$0xff]
    %v50 = vld [vmem:[%s1 + $0xd8] sm:$0xff]
    %v51 = vld [vmem:[%s1 + $0xe0] sm:$0xff]
    %v52 = vld [vmem:[%s1 + $0xe8] sm:$0xff]
    %v53 = vld [vmem:[%s1 + $0xf0] sm:$0xff]
    %v54 = vld [vmem:[%s1 + $0xf8] sm:$0xff]
    %v55 = vld [vmem:[%s1 + $0x100] sm:$0xff]
    %v56 = vld [vmem:[%s1 + $0x108] sm:$0xff]
    %v57 = vld [vmem:[%s1 + $0x110] sm:$0xff]
    %v58 = vld [vmem:[%s1 + $0x118] sm:$0xff]
    %v59 = vld [vmem:[%s1 + $0x120] sm:$0xff]
    %v60 = vld [vmem:[%s1 + $0x128] sm:$0xff]
    %v61 = vld [vmem:[%s1 + $0x130] sm:$0xff]
    %v62 = vld [vmem:[%s1 + $0x138] sm:$0xff]
    %v63 = vld [vmem:[%s1 + $0x140] sm:$0xff]
    %v64 = vld [vmem:[%s1 + $0x148] sm:$0xff]
    %v65 = vld [vmem:[%s1 + $0x150] sm:$0xff]
    %v66 = vld [vmem:[%s1 + $0x158] sm:$0xff]
    %v67 = vld [vmem:[%s1 + $0x160] sm:$0xff]
    %v68 = vld [vmem:[%s1 + $0x168] sm:$0xff]
    %v69 = vld [vmem:[%s1 + $0x170] sm:$0xff]
    %v70 = vld [vmem:[%s1 + $0x178] sm:$0xff]
    %v71 = vld [vmem:[%s1 + $0x180] sm:$0xff]
    %v72 = vld [vmem:[%s1 + $0x188] sm:$0xff]
    %v73 = vld [vmem:[%s1 + $0x190] sm:$0xff]
    %v74 = vld [vmem:[%s1 + $0x198] sm:$0xff]
    %v75 = vld [vmem:[%s1 + $0x1a0] sm:$0xff]
    %v76 = vld [vmem:[%s1 + $0x1a8] sm:$0xff]
    %v77 = vld [vmem:[%s1 + $0x1b0] sm:$0xff]
    %v78 = vld [vmem:[%s1 + $0x1b8] sm:$0xff]
    %v79 = vld [vmem:[%s1 + $0x1c0] sm:$0xff]
    %v80 = vld [vmem:[%s1 + $0x1c8] sm:$0xff]
    %v81 = vld [vmem:[%s1 + $0x1d0] sm:$0xff]
    %v82 = vld [vmem:[%s1 + $0x1d8] sm:$0xff]
    %v83 = vld [vmem:[%s1 + $0x1e0] sm:$0xff]
    %v84 = vld [vmem:[%s1 + $0x1e8] sm:$0xff]
    %v85 = vld [vmem:[%s1 + $0x1f0] sm:$0xff]
    %v86 = vld [vmem:[%s1 + $0x1f8] sm:$0xff]
    %v87 = vld [vmem:[%s1 + $0x200] sm:$0xff]
    %v88 = vld [vmem:[%s1 + $0x208] sm:$0xff]
    %v89 = vld [vmem:[%s1 + $0x210] sm:$0xff]
    %v90 = vld [vmem:[%s1 + $0x218] sm:$0xff]
    %v91 = vld [vmem:[%s1 + $0x220] sm:$0xff]
    %v92 = vld [vmem:[%s1 + $0x228] sm:$0xff]
    %v93 = vld [vmem:[%s1 + $0x230] sm:$0xff]
    %v94 = vld [vmem:[%s1 + $0x238] sm:$0xff]
    %v95 = vld [vmem:[%s2] sm:$0x1]
    %v97 = vperm.slane %v95, 0
    %101 = vst [vmem:[#allocation1] ss:$4 sm:$0xff] %v21
    %s102 = scalar_lea.vmem [#allocation1], 32
    %103 = vst [vmem:[%s102] ss:$4 sm:$0xff] %v22
    %v104 = vld.sshfl [vmem:[#allocation1] sm:$0xff pattern:$0x73625140]
    %v105 = vld.sshfl [vmem:[#allocation1 + $0x8] sm:$0xff pattern:$0x73625140]
    %v106 = vld.sshfl [vmem:[#allocation1 + $0x10] sm:$0xff pattern:$0x73625140]
    %v107 = vld.sshfl [vmem:[#allocation1 + $0x18] sm:$0xff pattern:$0x73625140]
    %v108 = vld.sshfl [vmem:[#allocation1 + $0x20] sm:$0xff pattern:$0x73625140]
    %vm113 = vcmask 523264
    %v114 = vsel %vm113, %v108, 0
    %116 = vmatpush.msra.mxu0 %v38
    %117 = vmatpush.msra.mxu0 %v37
    %118 = vmatpush.msra.mxu0 %v36
    %119 = vmatpush.msra.mxu0 %v35
    %120 = vmatpush.msra.mxu0 %v34
    %121 = vmatpush.msra.mxu0 %v33
    %122 = vmatpush.msra.mxu0 %v32
    %123 = vmatpush.msra.mxu0 %v31
    %124 = vmatpush.msra.mxu0 %v30
    %125 = vmatpush.msra.mxu0 %v29
    %126 = vmatpush.msra.mxu0 %v28
    %127 = vmatpush.msra.mxu0 %v27
    %128 = vmatpush.msra.mxu0 %v26
    %129 = vmatpush.msra.mxu0 %v25
    %130 = vmatpush.msra.mxu0 %v24
    %131 = vmatpush.msra.mxu0 %v23
    %132 = vmatmul.f32.gmra.mxu0 %v104
    %v133 = vpop.f32.mrf.mxu0
    %v134 = vadd.f32 %v97, %v133
    %135 = vdwg.mxu0
    %136 = vmatpush.msra.mxu0 %v54
    %137 = vmatpush.msra.mxu0 %v53
    %138 = vmatpush.msra.mxu0 %v52
    %139 = vmatpush.msra.mxu0 %v51
    %140 = vmatpush.msra.mxu0 %v50
    %141 = vmatpush.msra.mxu0 %v49
    %142 = vmatpush.msra.mxu0 %v48
    %143 = vmatpush.msra.mxu0 %v47
    %144 = vmatpush.msra.mxu0 %v46
    %145 = vmatpush.msra.mxu0 %v45
    %146 = vmatpush.msra.mxu0 %v44
    %147 = vmatpush.msra.mxu0 %v43
    %148 = vmatpush.msra.mxu0 %v42
    %149 = vmatpush.msra.mxu0 %v41
    %150 = vmatpush.msra.mxu0 %v40
    %151 = vmatpush.msra.mxu0 %v39
    %152 = vmatmul.f32.gmra.mxu0 %v105
    %v153 = vpop.f32.mrf.mxu0
    %v154 = vadd.f32 %v134, %v153
    %155 = vdwg.mxu0
    %156 = vmatpush.msra.mxu0 %v70
    %157 = vmatpush.msra.mxu0 %v69
    %158 = vmatpush.msra.mxu0 %v68
    %159 = vmatpush.msra.mxu0 %v67
    %160 = vmatpush.msra.mxu0 %v66
    %161 = vmatpush.msra.mxu0 %v65
    %162 = vmatpush.msra.mxu0 %v64
    %163 = vmatpush.msra.mxu0 %v63
    %164 = vmatpush.msra.mxu0 %v62
    %165 = vmatpush.msra.mxu0 %v61
    %166 = vmatpush.msra.mxu0 %v60
    %167 = vmatpush.msra.mxu0 %v59
    %168 = vmatpush.msra.mxu0 %v58
    %169 = vmatpush.msra.mxu0 %v57
    %170 = vmatpush.msra.mxu0 %v56
    %171 = vmatpush.msra.mxu0 %v55
    %172 = vmatmul.f32.gmra.mxu0 %v106
    %v173 = vpop.f32.mrf.mxu0
    %v174 = vadd.f32 %v154, %v173
    %175 = vdwg.mxu0
    %176 = vmatpush.msra.mxu0 %v86
    %177 = vmatpush.msra.mxu0 %v85
    %178 = vmatpush.msra.mxu0 %v84
    %179 = vmatpush.msra.mxu0 %v83
    %180 = vmatpush.msra.mxu0 %v82
    %181 = vmatpush.msra.mxu0 %v81
    %182 = vmatpush.msra.mxu0 %v80
    %183 = vmatpush.msra.mxu0 %v79
    %184 = vmatpush.msra.mxu0 %v78
    %185 = vmatpush.msra.mxu0 %v77
    %186 = vmatpush.msra.mxu0 %v76
    %187 = vmatpush.msra.mxu0 %v75
    %188 = vmatpush.msra.mxu0 %v74
    %189 = vmatpush.msra.mxu0 %v73
    %190 = vmatpush.msra.mxu0 %v72
    %191 = vmatpush.msra.mxu0 %v71
    %192 = vmatmul.f32.gmra.mxu0 %v107
    %v193 = vpop.f32.mrf.mxu0
    %v194 = vadd.f32 %v174, %v193
    %195 = vdwg.mxu0
    %196 = vmatpush.msra.mxu0 0.0
    %197 = vmatpush.msra.mxu0 0.0
    %198 = vmatpush.msra.mxu0 0.0
    %199 = vmatpush.msra.mxu0 0.0
    %200 = vmatpush.msra.mxu0 0.0
    %201 = vmatpush.msra.mxu0 0.0
    %202 = vmatpush.msra.mxu0 0.0
    %203 = vmatpush.msra.mxu0 0.0
    %204 = vmatpush.msra.mxu0 %v94
    %205 = vmatpush.msra.mxu0 %v93
    %206 = vmatpush.msra.mxu0 %v92
    %207 = vmatpush.msra.mxu0 %v91
    %208 = vmatpush.msra.mxu0 %v90
    %209 = vmatpush.msra.mxu0 %v89
    %210 = vmatpush.msra.mxu0 %v88
    %211 = vmatpush.msra.mxu0 %v87
    %212 = vmatmul.f32.gmra.mxu0 %v114
    %v213 = vpop.f32.mrf.mxu0
    %v214 = vadd.f32 %v194, %v213
    %215 = vdwg.mxu0
    %v216 = vmax.f32 %v214, 0.0
    %v217 = vld [vmem:[%s3] sm:$0xff]
    %v218 = vld [vmem:[%s3 + $0x8] sm:$0xff]
    %v219 = vld [vmem:[%s3 + $0x10] sm:$0xff]
    %v220 = vld [vmem:[%s3 + $0x18] sm:$0xff]
    %v221 = vld [vmem:[%s3 + $0x20] sm:$0xff]
    %v222 = vld [vmem:[%s3 + $0x28] sm:$0xff]
    %v223 = vld [vmem:[%s3 + $0x30] sm:$0xff]
    %v224 = vld [vmem:[%s3 + $0x38] sm:$0xff]
    %v225 = vld [vmem:[%s4] sm:$0x1]
    %v227 = vperm.slane %v225, 0
    %v230 = vsel %vm113, %v216, 0
    %232 = vmatpush.msra.mxu0 0.0
    %233 = vmatpush.msra.mxu0 0.0
    %234 = vmatpush.msra.mxu0 0.0
    %235 = vmatpush.msra.mxu0 0.0
    %236 = vmatpush.msra.mxu0 0.0
    %237 = vmatpush.msra.mxu0 0.0
    %238 = vmatpush.msra.mxu0 0.0
    %239 = vmatpush.msra.mxu0 0.0
    %240 = vmatpush.msra.mxu0 %v224
    %241 = vmatpush.msra.mxu0 %v223
    %242 = vmatpush.msra.mxu0 %v222
    %243 = vmatpush.msra.mxu0 %v221
    %244 = vmatpush.msra.mxu0 %v220
    %245 = vmatpush.msra.mxu0 %v219
    %246 = vmatpush.msra.mxu0 %v218
    %247 = vmatpush.msra.mxu0 %v217
    %248 = vmatmul.f32.gmra.mxu0 %v230
    %v249 = vpop.f32.mrf.mxu0
    %v250 = vadd.f32 %v227, %v249
    %251 = vdwg.mxu0
    %v252 = vmax.f32 %v250, 0.0
    %253 = vst [vmem:[#allocation2] sm:$0x3] %v252
    // Predicated region
    $region22: #{nature_cnn_forward.5} parent=1 // pred_check
      _
    $region23: #{nature_cnn_forward.5} parent=1 // pred_check_branch
      %255 = sbr.rel (0) target = $region25
    $region24: #{nature_cnn_forward.5} parent=1 // pred_region
      %257 = vsyncadd [#allocation3], 0
      %s259 = sshll.u32 [#allocation2], 4
      %s260 = int_to_ptr.vmem [resolvable:$true] %s259
      %s261 = sshll.u32 %s5, 4
      %s262 = int_to_ptr.hbm [resolvable:$true] %s261
      %264 = dma.vmem_to_hbm [thread:$0]  %s260, 32, %s262, [#allocation3]
    $region25: #{nature_cnn_forward.5} parent=1 // pred_fallthru
      _
    // Predicated region
    $region26: #{nature_cnn_forward.5} parent=1 // pred_check
      _
    $region27: #{nature_cnn_forward.5} parent=1 // pred_check_branch
      %266 = sbr.rel (0) target = $region29
    $region28: #{nature_cnn_forward.5} parent=1 // pred_region
      %268 = dma.done [#allocation3], 32
    $region29: #{nature_cnn_forward.5} parent=1 // pred_fallthru
      _
    %269 = vsyncpa [#allocation3], 1

</llo_original>
